<compile_context>
chip_gen: v7x
topology: tpu7x:2x2x1
jax: 0.10.0
libtpu: 0.0.40
codegen_flags: <defaults>
</compile_context>

<pallas_src>
import functools

import jax
import jax.numpy as jnp
from jax import lax
from jax.experimental import pallas as pl
from jax.experimental.pallas import tpu as pltpu


def _round_up(n, m):
    return ((n + m - 1) // m) * m


def _attention_dot_kernel(x_ref, y_ref, out_ref, *, dot_dtype):
    """score[j, s] = sum_h y[j, h] * x[s, h] for one batch_x slice.

    x_ref:   (S_pad, H_pad)   f32 VMEM
    y_ref:   (By_pad, H_pad)  f32 VMEM
    out_ref: (By_pad, S_pad)  f32 VMEM
    """
    x = x_ref[...].astype(dot_dtype)
    y = y_ref[...].astype(dot_dtype)
    # Contract the (128-aligned) hidden dim of both operands; no in-kernel
    # transpose needed, result is already (By_pad, S_pad) = the output layout.
    out_ref[...] = lax.dot_general(
        y, x, (((1,), (1,)), ((), ())),
        preferred_element_type=jnp.float32)


def _attention_general_kernel(x_ref, y_ref, wt_ref, b_ref, out_ref, *, dot_dtype):
    """Fused Linear (x @ W.T + b) + dot attention for one batch_x slice.

    x_ref:   (S_pad, H_pad)   f32 VMEM
    y_ref:   (By_pad, H_pad)  f32 VMEM
    wt_ref:  (H_pad, H_pad)   f32 VMEM  (W.T, grid-resident: same block every step)
    b_ref:   (1, H_pad)       f32 VMEM  (grid-resident)
    out_ref: (By_pad, S_pad)  f32 VMEM
    """
    x = x_ref[...].astype(dot_dtype)
    wt = wt_ref[...].astype(dot_dtype)
    xw = jnp.dot(x, wt, preferred_element_type=jnp.float32)   # (S_pad, H_pad)
    xw = xw + b_ref[...]                                       # bias add in f32
    y = y_ref[...].astype(dot_dtype)
    out_ref[...] = lax.dot_general(
        y, xw.astype(dot_dtype), (((1,), (1,)), ((), ())),
        preferred_element_type=jnp.float32)


@functools.partial(jax.jit, static_argnames=("att_type", "matmul_dtype"))
def attention_forward(x, y, w=None, b=None, *, att_type="dot",
                      matmul_dtype=jnp.bfloat16):
    """Pallas implementation of Attention.forward.

    x: (Bx, 1, S, H), y: (Bx, By, H)  ->  (Bx, By, S) float32 scores.
    """
    Bx, one, S, H = x.shape
    assert one == 1, "x must be (batch_x, 1, seq, h_dim)"
    By = y.shape[1]

    S_pad = _round_up(S, 128)     # lane-dense output last dim
    H_pad = _round_up(H, 128)     # lane-dense contraction dim
    By_pad = _round_up(By, 8)     # sublane-aligned output rows

    # Wrapper-side layout plumbing: zero padding does not change the dot
    # products; padded rows/cols are sliced off at the end.
    x_p = jnp.pad(x[:, 0].astype(jnp.float32),
                  ((0, 0), (0, S_pad - S), (0, H_pad - H)))
    y_p = jnp.pad(y.astype(jnp.float32),
                  ((0, 0), (0, By_pad - By), (0, H_pad - H)))

    x_spec = pl.BlockSpec((None, S_pad, H_pad), lambda i: (i, 0, 0))
    y_spec = pl.BlockSpec((None, By_pad, H_pad), lambda i: (i, 0, 0))
    out_spec = pl.BlockSpec((None, By_pad, S_pad), lambda i: (i, 0, 0))
    out_shape = jax.ShapeDtypeStruct((Bx, By_pad, S_pad), jnp.float32)
    cparams = pltpu.CompilerParams(dimension_semantics=("parallel",))

    if att_type == "general":
        wt_p = jnp.pad(w.T.astype(jnp.float32),
                       ((0, H_pad - H), (0, H_pad - H)))
        b_p = jnp.pad(b.astype(jnp.float32), (0, H_pad - H)).reshape(1, H_pad)
        kernel = functools.partial(_attention_general_kernel,
                                   dot_dtype=matmul_dtype)
        out_p = pl.pallas_call(
            kernel,
            grid=(Bx,),
            in_specs=[x_spec, y_spec,
                      pl.BlockSpec((H_pad, H_pad), lambda i: (0, 0)),
                      pl.BlockSpec((1, H_pad), lambda i: (0, 0))],
            out_specs=out_spec,
            out_shape=out_shape,
            compiler_params=cparams,
        )(x_p, y_p, wt_p, b_p)
    else:  # 'dot' attention (no parameters)
        kernel = functools.partial(_attention_dot_kernel,
                                   dot_dtype=matmul_dtype)
        out_p = pl.pallas_call(
            kernel,
            grid=(Bx,),
            in_specs=[x_spec, y_spec],
            out_specs=out_spec,
            out_shape=out_shape,
            compiler_params=cparams,
        )(x_p, y_p)

    return out_p[:, :By, :S]


def _reference(x, y, att_type="dot", w=None, b=None):
    """Pure-JAX mirror of the PyTorch forward."""
    xx = x[:, 0].astype(jnp.float32)                 # (Bx, S, H)
    if att_type == "general":
        xx = xx @ w.T.astype(jnp.float32) + b.astype(jnp.float32)
    return jnp.einsum("bjh,bsh->bjs", y.astype(jnp.float32), xx)


if __name__ == "__main__":
    key = jax.random.PRNGKey(0)
    k1, k2, k3, k4 = jax.random.split(key, 4)

    Bx, By, S, H = 2, 4, 8, 32        # batch_x, batch_y, seq, h_dim
    x = jax.random.normal(k1, (Bx, 1, S, H), dtype=jnp.float32)
    y = jax.random.normal(k2, (Bx, By, H), dtype=jnp.float32)
    # The spec says x and y should already be normalized.
    x = x / jnp.linalg.norm(x, axis=-1, keepdims=True)
    y = y / jnp.linalg.norm(y, axis=-1, keepdims=True)

    w = jax.random.normal(k3, (H, H), dtype=jnp.float32) / jnp.sqrt(H)
    b = 0.1 * jax.random.normal(k4, (H,), dtype=jnp.float32)

    # ---- att_type='dot', f32 MXU operands (conservative tolerance covers any
    #      MXU f32-pass implementation; typically ~1e-6 exact) ----
    out_f32 = jax.block_until_ready(
        attention_forward(x, y, att_type="dot", matmul_dtype=jnp.float32))
    ref_dot = _reference(x, y, att_type="dot")
    assert out_f32.shape == (Bx, By, S)
    assert jnp.allclose(out_f32, ref_dot, rtol=1e-2, atol=1e-2), "dot/f32 mismatch"

    # ---- att_type='dot', bf16 MXU operands (perf-review default) ----
    out_bf16 = jax.block_until_ready(attention_forward(x, y, att_type="dot"))
    assert jnp.allclose(out_bf16, ref_dot, rtol=3e-2, atol=3e-2), "dot/bf16 mismatch"

    # ---- att_type='general' (fused Linear), f32 MXU operands ----
    out_gen = jax.block_until_ready(
        attention_forward(x, y, w, b, att_type="general",
                          matmul_dtype=jnp.float32))
    ref_gen = _reference(x, y, att_type="general", w=w, b=b)
    assert jnp.allclose(out_gen, ref_gen, rtol=1e-2, atol=1e-2), "general mismatch"

    print("KERNEL_OK")
</pallas_src>

<mosaic_0001>
module attributes {stable_mosaic.version = 11 : i64} {
  func.func @_attention_dot_kernel(%arg0: i32, %arg1: memref<1x128x128xf32, #tpu.memory_space<vmem>>, %arg2: memref<1x8x128xf32, #tpu.memory_space<vmem>>, %arg3: memref<1x8x128xf32, #tpu.memory_space<vmem>>) attributes {dimension_semantics = [#tpu.dimension_semantics<parallel>], iteration_bounds = array<i64: 2>, scalar_prefetch = 0 : i64, scratch_operands = 0 : i64, tpu.core_type = #tpu.core_type<tc>, window_params = [{transform_indices = @transform_0, window_bounds = array<i64: 1, 128, 128>}, {transform_indices = @transform_1, window_bounds = array<i64: 1, 8, 128>}, {transform_indices = @transform_2, window_bounds = array<i64: 1, 8, 128>}]} {
    %c0 = arith.constant 0 : index
    %c0_0 = arith.constant 0 : index
    %c0_1 = arith.constant 0 : index
    %0 = vector.load %arg1[%c0, %c0_0, %c0_1] : memref<1x128x128xf32, #tpu.memory_space<vmem>>, vector<1x128x128xf32>
    %1 = vector.shape_cast %0 : vector<1x128x128xf32> to vector<128x128xf32>
    %c0_2 = arith.constant 0 : index
    %c0_3 = arith.constant 0 : index
    %c0_4 = arith.constant 0 : index
    %2 = vector.load %arg2[%c0_2, %c0_3, %c0_4] : memref<1x8x128xf32, #tpu.memory_space<vmem>>, vector<1x8x128xf32>
    %3 = vector.shape_cast %2 : vector<1x8x128xf32> to vector<8x128xf32>
    %cst = arith.constant dense<0.000000e+00> : vector<8x128xf32>
    %4 = tpu.matmul %3, %1, %cst {dimension_numbers = #tpu.dot_dimension_numbers<[1], [1], [0], [0], [0, 0, 1, 0], [], []>} : vector<8x128xf32>, vector<128x128xf32>, vector<8x128xf32> -> vector<8x128xf32>
    %c0_5 = arith.constant 0 : index
    %c0_6 = arith.constant 0 : index
    %c0_7 = arith.constant 0 : index
    %5 = vector.load %arg3[%c0_5, %c0_6, %c0_7] : memref<1x8x128xf32, #tpu.memory_space<vmem>>, vector<1x8x128xf32>
    %6 = vector.shape_cast %5 : vector<1x8x128xf32> to vector<8x128xf32>
    %7 = vector.shape_cast %4 : vector<8x128xf32> to vector<1x8x128xf32>
    tpu.vector_store %arg3[%c0_5, %c0_6, %c0_7], %7 {strides = array<i32>} : memref<1x8x128xf32, #tpu.memory_space<vmem>>, vector<1x8x128xf32>,
    return
  }
  func.func @transform_0(%arg0: i32) -> (i32, i32, i32) {
    %c0_i32 = arith.constant 0 : i32
    %c0_i32_0 = arith.constant 0 : i32
    %c0_i32_1 = arith.constant 0 : i32
    return %arg0, %c0_i32, %c0_i32_0 : i32, i32, i32
  }
  func.func @transform_1(%arg0: i32) -> (i32, i32, i32) {
    %c0_i32 = arith.constant 0 : i32
    %c0_i32_0 = arith.constant 0 : i32
    %c0_i32_1 = arith.constant 0 : i32
    return %arg0, %c0_i32, %c0_i32_0 : i32, i32, i32
  }
  func.func @transform_2(%arg0: i32) -> (i32, i32, i32) {
    %c0_i32 = arith.constant 0 : i32
    %c0_i32_0 = arith.constant 0 : i32
    %c0_i32_1 = arith.constant 0 : i32
    return %arg0, %c0_i32, %c0_i32_0 : i32, i32, i32
  }
}

</mosaic_0001>

<llo_original>
// kernel: attention_forward.1
$region0: #{attention_forward.1}
  #allocation0 [shape = 'u32[]', space=smem, size = 0x4, offset = 0x4, fixed_abs, tag = 'smem constant byte address 0x4 - core index']
  #allocation1 [shape = 'u32[144,128]{1,0:T(1,128)}', space=vmem, size = 0x12000, scoped, tag = 'internal scratch']
  %s0 = inlined_call_operand.vmem [shape: f32[2,128,128], index: 0, kind: input, shape index: {}]
  %s1 = inlined_call_operand.vmem [shape: f32[2,8,128], index: 1, kind: input, shape index: {}]
  %s2 = inlined_call_operand.vmem [shape: f32[2,8,128], index: 2, kind: output, shape index: {}]
  %s3 = sld [smem:[#allocation0]]
  $region41: #{attention_forward.1} parent=0
    _
  %s5 = ssub.s32 1, %s3
  %s6 = scalar_select 0, %s5, %s3
  loop: start=0, step=1, limit=4
  $region2: #{attention_forward.1} parent=0 // loop_pre_header
    _
  $region3: #{attention_forward.1} parent=0 // loop_header
    %s8 = sphi 0, %s12
    %p9 = scmp.ge.s32.totalorder %s8, 4
    %s18 = sphi 0, %s20
    %s21 = sphi 0, %s18
    %s22 = sphi 0, %s21
    %s38 = sphi 0, %s22
    %s44 = sphi 0, %s46
    %s47 = sphi 0, %s44
    %s48 = sphi 0, %s47
    %s64 = sphi 0, %s48
    %s70 = sphi 0, %s72
    %s73 = sphi 0, %s70
    %s74 = sphi 0, %s73
    %s90 = sphi 0, %s74
  $region4: #{attention_forward.1} parent=0 // loop_header_branch
    %11 = sbr.rel (%p9) target = $region8
  $region5: #{attention_forward.1} parent=0 // loop_body
    %s13 = ssub.s32 %s8, 1
    %s14 = ssub.s32 %s8, 2
    %s15 = sadd.s32 %s8, 1
    %s16 = ssub.s32 %s8, %s15
    %p17 = scmp.eq.s32.totalorder %s16, 0
    %s19 = sadd.s32 %s18, 1
    %s20 = scalar_select %p17, %s18, %s19
    %p23 = pneg %p17
    %p24 = scmp.eq.s32.totalorder %s8, 1
    %p25 = por %p23, %p24
    %p26 = scmp.ne.s32.totalorder %s18, %s21
    %p27 = scmp.eq.s32.totalorder %s8, 0
    %p28 = por %p26, %p27
    %p29 = scmp.ne.s32.totalorder %s18, %s21
    %p30 = scmp.eq.s32.totalorder %s13, 1
    %p31 = por %p29, %p30
    %p32 = scmp.ne.s32.totalorder %s21, %s22
    %p33 = scmp.eq.s32.totalorder %s13, 0
    %p34 = por %p32, %p33
    %p35 = scmp.ne.s32.totalorder %s21, %s22
    %p36 = scmp.eq.s32.totalorder %s14, 1
    %p37 = por %p35, %p36
    %p39 = scmp.ne.s32.totalorder %s22, %s38
    %p40 = scmp.eq.s32.totalorder %s14, 0
    %p41 = por %p39, %p40
    %s42 = ssub.s32 %s8, %s15
    %p43 = scmp.eq.s32.totalorder %s42, 0
    %s45 = sadd.s32 %s44, 1
    %s46 = scalar_select %p43, %s44, %s45
    %p49 = pneg %p43
    %p50 = scmp.eq.s32.totalorder %s8, 1
    %p51 = por %p49, %p50
    %p52 = scmp.ne.s32.totalorder %s44, %s47
    %p53 = scmp.eq.s32.totalorder %s8, 0
    %p54 = por %p52, %p53
    %p55 = scmp.ne.s32.totalorder %s44, %s47
    %p56 = scmp.eq.s32.totalorder %s13, 1
    %p57 = por %p55, %p56
    %p58 = scmp.ne.s32.totalorder %s47, %s48
    %p59 = scmp.eq.s32.totalorder %s13, 0
    %p60 = por %p58, %p59
    %p61 = scmp.ne.s32.totalorder %s47, %s48
    %p62 = scmp.eq.s32.totalorder %s14, 1
    %p63 = por %p61, %p62
    %p65 = scmp.ne.s32.totalorder %s48, %s64
    %p66 = scmp.eq.s32.totalorder %s14, 0
    %p67 = por %p65, %p66
    %s68 = ssub.s32 %s8, %s15
    %p69 = scmp.eq.s32.totalorder %s68, 0
    %s71 = sadd.s32 %s70, 1
    %s72 = scalar_select %p69, %s70, %s71
    %p75 = pneg %p69
    %p76 = scmp.eq.s32.totalorder %s8, 1
    %p77 = por %p75, %p76
    %p78 = scmp.ne.s32.totalorder %s70, %s73
    %p79 = scmp.eq.s32.totalorder %s8, 0
    %p80 = por %p78, %p79
    %p81 = scmp.ne.s32.totalorder %s70, %s73
    %p82 = scmp.eq.s32.totalorder %s13, 1
    %p83 = por %p81, %p82
    %p84 = scmp.ne.s32.totalorder %s73, %s74
    %p85 = scmp.eq.s32.totalorder %s13, 0
    %p86 = por %p84, %p85
    %p87 = scmp.ne.s32.totalorder %s73, %s74
    %p88 = scmp.eq.s32.totalorder %s14, 1
    %p89 = por %p87, %p88
    %p91 = scmp.ne.s32.totalorder %s74, %s90
    %p92 = scmp.eq.s32.totalorder %s14, 0
    %p93 = por %p91, %p92
    %p94 = scmp.le.s32.totalorder 1, %s8
    %p95 = scmp.lt.s32.totalorder %s8, 3
    %p96 = pnand %p94, %p95
    %p97 = pneg %p96
    // Predicated region
    $region9: #{attention_forward.1} parent=5 // pred_check
      _
    $region10: #{attention_forward.1} parent=5 // pred_check_branch
      %99 = sbr.rel (%p96) target = $region12
    $region11: #{attention_forward.1} parent=5 // pred_region
      %s100 = ssub.s32 %s8, 1
    $region12: #{attention_forward.1} parent=5 // pred_fallthru
      _
    %p101 = scmp.lt.s32.totalorder %s8, 2
    // Predicated region
    $region13: #{attention_forward.1} parent=5 // pred_check
      %p102 = pneg %p101
    $region14: #{attention_forward.1} parent=5 // pred_check_branch
      %104 = sbr.rel (%p102) target = $region16
    $region15: #{attention_forward.1} parent=5 // pred_region
      // Predicated region
      $region17: #{attention_forward.1} parent=15 // pred_check
        %p105 = pneg %p28
      $region18: #{attention_forward.1} parent=15 // pred_check_branch
        %107 = sbr.rel (%p105) target = $region20
      $region19: #{attention_forward.1} parent=15 // pred_region
        %p108 = scmp.lt.s32.totalorder %s8, 1
        %s109 = scalar_select %p108, %s8, 1
        %s110 = smul.addr %s109, 16
        %s111 = smul.addr %s110, 8
        %s112 = scalar_lea.vmem %s0, %s111
      $region20: #{attention_forward.1} parent=15 // pred_fallthru
        _
      // Predicated region
      $region21: #{attention_forward.1} parent=15 // pred_check
        %p113 = pneg %p54
      $region22: #{attention_forward.1} parent=15 // pred_check_branch
        %115 = sbr.rel (%p113) target = $region24
      $region23: #{attention_forward.1} parent=15 // pred_region
        %p116 = scmp.lt.s32.totalorder %s8, 1
        %s117 = scalar_select %p116, %s8, 1
        %s118 = smul.addr %s117, 8
        %s119 = scalar_lea.vmem %s1, %s118
      $region24: #{attention_forward.1} parent=15 // pred_fallthru
        _
    $region16: #{attention_forward.1} parent=5 // pred_fallthru
      _
    %p120 = scmp.le.s32.totalorder 1, %s8
    %p121 = scmp.lt.s32.totalorder %s8, 3
    %p122 = pnand %p120, %p121
    %p123 = pneg %p122
    // Predicated region
    $region25: #{attention_forward.1} parent=5 // pred_check
      _
    $region26: #{attention_forward.1} parent=5 // pred_check_branch
      %125 = sbr.rel (%p122) target = $region28
    $region27: #{attention_forward.1} parent=5 // pred_region
      %s126 = ssub.s32 %s8, 1
      %p127 = scmp.lt.s32.totalorder %s13, 1
      %s128 = scalar_select %p127, %s13, 1
      %s129 = smul.addr %s128, 16
      %s130 = smul.addr %s129, 8
      %s131 = scalar_lea.vmem %s0, %s130
      %p132 = pneg %p34
      %p133 = pneg %p31
      %p134 = scmp.lt.s32.totalorder %s13, 1
      %s135 = scalar_select %p134, %s13, 1
      %s136 = smul.addr %s135, 8
      %s137 = scalar_lea.vmem %s1, %s136
      %p138 = pneg %p60
      %p139 = pneg %p57
      %p140 = pneg %p86
      %p141 = pneg %p83
      %p142 = scmp.lt.s32.totalorder %s13, 1
      %s143 = scalar_select %p142, %s13, 1
      %s144 = smul.addr %s143, 8
      %s145 = scalar_lea.vmem %s2, %s144
      %p146 = scmp.lt.s32.totalorder %s13, 1
      %s147 = scalar_select %p146, %s13, 1
      %s148 = smul.addr %s147, 16
      %s149 = smul.addr %s148, 8
      %s150 = scalar_lea.vmem %s0, %s149
      %p151 = scmp.lt.s32.totalorder %s13, 1
      %s152 = scalar_select %p151, %s13, 1
      %s153 = smul.addr %s152, 8
      %s154 = scalar_lea.vmem %s1, %s153
      %p155 = scmp.lt.s32.totalorder %s13, 1
      %s156 = scalar_select %p155, %s13, 1
      %s157 = smul.addr %s156, 8
      %s158 = scalar_lea.vmem %s2, %s157
      %v159 = vld [vmem:[%s150] sm:$0xff]
      %v160 = vld [vmem:[%s150 + $0x8] sm:$0xff]
      %v161 = vld [vmem:[%s150 + $0x10] sm:$0xff]
      %v162 = vld [vmem:[%s150 + $0x18] sm:$0xff]
      %v163 = vld [vmem:[%s150 + $0x20] sm:$0xff]
      %v164 = vld [vmem:[%s150 + $0x28] sm:$0xff]
      %v165 = vld [vmem:[%s150 + $0x30] sm:$0xff]
      %v166 = vld [vmem:[%s150 + $0x38] sm:$0xff]
      %v167 = vld [vmem:[%s150 + $0x40] sm:$0xff]
      %v168 = vld [vmem:[%s150 + $0x48] sm:$0xff]
      %v169 = vld [vmem:[%s150 + $0x50] sm:$0xff]
      %v170 = vld [vmem:[%s150 + $0x58] sm:$0xff]
      %v171 = vld [vmem:[%s150 + $0x60] sm:$0xff]
      %v172 = vld [vmem:[%s150 + $0x68] sm:$0xff]
      %v173 = vld [vmem:[%s150 + $0x70] sm:$0xff]
      %v174 = vld [vmem:[%s150 + $0x78] sm:$0xff]
      %v175 = vld [vmem:[%s154] sm:$0xff]
      %176 = vmatprep.subr.mxu0 0.0
      %177 = vmatpush1.xpose.msra.mxu0 %v159
      %178 = vmatprep.subr.mxu0 0.0
      %179 = vmatpush1.xpose.msra.mxu0 %v160
      %180 = vmatprep.subr.mxu0 0.0
      %181 = vmatpush1.xpose.msra.mxu0 %v161
      %182 = vmatprep.subr.mxu0 0.0
      %183 = vmatpush1.xpose.msra.mxu0 %v162
      %184 = vmatprep.subr.mxu0 0.0
      %185 = vmatpush1.xpose.msra.mxu0 %v163
      %186 = vmatprep.subr.mxu0 0.0
      %187 = vmatpush1.xpose.msra.mxu0 %v164
      %188 = vmatprep.subr.mxu0 0.0
      %189 = vmatpush1.xpose.msra.mxu0 %v165
      %190 = vmatprep.subr.mxu0 0.0
      %191 = vmatpush1.xpose.msra.mxu0 %v166
      %192 = vmatprep.subr.mxu0 0.0
      %193 = vmatpush1.xpose.msra.mxu0 %v167
      %194 = vmatprep.subr.mxu0 0.0
      %195 = vmatpush1.xpose.msra.mxu0 %v168
      %196 = vmatprep.subr.mxu0 0.0
      %197 = vmatpush1.xpose.msra.mxu0 %v169
      %198 = vmatprep.subr.mxu0 0.0
      %199 = vmatpush1.xpose.msra.mxu0 %v170
      %200 = vmatprep.subr.mxu0 0.0
      %201 = vmatpush1.xpose.msra.mxu0 %v171
      %202 = vmatprep.subr.mxu0 0.0
      %203 = vmatpush1.xpose.msra.mxu0 %v172
      %204 = vmatprep.subr.mxu0 0.0
      %205 = vmatpush1.xpose.msra.mxu0 %v173
      %206 = vmatprep.subr.mxu0 0.0
      %207 = vmatpush1.xpose.msra.mxu0 %v174
      %208 = vmatprep.subr.mxu0 0.0
      %209 = vmatpush1.xpose.msra.mxu0 0.0
      %210 = vmatprep.subr.mxu0 0.0
      %211 = vmatpush1.xpose.msra.mxu0 0.0
      %212 = vmatprep.subr.mxu0 0.0
      %213 = vmatpush1.xpose.msra.mxu0 0.0
      %214 = vmatprep.subr.mxu0 0.0
      %215 = vmatpush1.xpose.msra.mxu0 0.0
      %216 = vmatprep.subr.mxu0 0.0
      %217 = vmatpush1.xpose.msra.mxu0 0.0
      %218 = vmatprep.subr.mxu0 0.0
      %219 = vmatpush1.xpose.msra.mxu0 0.0
      %220 = vmatprep.subr.mxu0 0.0
      %221 = vmatpush1.xpose.msra.mxu0 0.0
      %222 = vmatprep.subr.mxu0 0.0
      %223 = vmatpush1.xpose.msra.mxu0 0.0
      %224 = vmatprep.subr.mxu0 0.0
      %225 = vmatpush1.xpose.msra.mxu0 0.0
      %226 = vmatprep.subr.mxu0 0.0
      %227 = vmatpush1.xpose.msra.mxu0 0.0
      %228 = vmatprep.subr.mxu0 0.0
      %229 = vmatpush1.xpose.msra.mxu0 0.0
      %230 = vmatprep.subr.mxu0 0.0
      %231 = vmatpush1.xpose.msra.mxu0 0.0
      %232 = vmatprep.subr.mxu0 0.0
      %233 = vmatpush1.xpose.msra.mxu0 0.0
      %234 = vmatprep.subr.mxu0 0.0
      %235 = vmatpush1.xpose.msra.mxu0 0.0
      %236 = vmatprep.subr.mxu0 0.0
      %237 = vmatpush1.xpose.msra.mxu0 0.0
      %238 = vmatprep.subr.mxu0 0.0
      %239 = vmatpush1.xpose.msra.mxu0 0.0
      %240 = vmatprep.mubr.f32.mxu0 0.0
      %241 = vmatmul.mubr.f32.gmra.mrb[0].mxu0 %v175
      %v242 = vpop.f32.mrb[0].mxu0
      %v243 = vadd.f32 0.0, %v242
      %v244 = vpop.f32.mrb[0].mxu0
      %245 = vdwg.mxu0
      %246 = vst [vmem:[%s158] sm:$0xff] %v243
      %p247 = scmp.lt.s32.totalorder %s13, 1
      %s248 = scalar_select %p247, %s13, 1
      %s249 = smul.addr %s248, 8
      %s250 = scalar_lea.vmem %s2, %s249
      // Predicated region
      $region29: #{attention_forward.1} parent=27 // pred_check
        %p251 = pneg %p83
      $region30: #{attention_forward.1} parent=27 // pred_check_branch
        %253 = sbr.rel (%p251) target = $region32
      $region31: #{attention_forward.1} parent=27 // pred_region
        _
      $region32: #{attention_forward.1} parent=27 // pred_fallthru
        _
    $region28: #{attention_forward.1} parent=5 // pred_fallthru
      _
    %p254 = scmp.le.s32.totalorder 2, %s8
    // Predicated region
    $region33: #{attention_forward.1} parent=5 // pred_check
      %p255 = pneg %p254
    $region34: #{attention_forward.1} parent=5 // pred_check_branch
      %257 = sbr.rel (%p255) target = $region36
    $region35: #{attention_forward.1} parent=5 // pred_region
      %s258 = ssub.s32 %s8, 2
      // Predicated region
      $region37: #{attention_forward.1} parent=35 // pred_check
        %p259 = pneg %p89
      $region38: #{attention_forward.1} parent=35 // pred_check_branch
        %261 = sbr.rel (%p259) target = $region40
      $region39: #{attention_forward.1} parent=35 // pred_region
        %p262 = scmp.lt.s32.totalorder %s14, 1
        %s263 = scalar_select %p262, %s14, 1
        %s264 = smul.addr %s263, 8
        %s265 = scalar_lea.vmem %s2, %s264
      $region40: #{attention_forward.1} parent=35 // pred_fallthru
        _
    $region36: #{attention_forward.1} parent=5 // pred_fallthru
      _
  $region6: #{attention_forward.1} parent=0 // loop_footer
    %s12 = sadd.s32 1, %s8
  $region7: #{attention_forward.1} parent=0 // loop_footer_branch
    %7 = sbr.rel target = $region3
  $region8: #{attention_forward.1} parent=0 // loop_exit
    _

</llo_original>
